<compile_context>
chip_gen: v6e
topology: v6e:2x2x1
jax: 0.10.0
libtpu: 0.0.40
codegen_flags: <defaults>
</compile_context>

<pallas_src>
import functools

import jax
import jax.numpy as jnp
import numpy as np
from jax import lax
from jax.experimental import pallas as pl
from jax.experimental.pallas import tpu as pltpu


# ----------------------------------------------------------------------------
# Fused single-tile kernel (small n): is_first + rank + scatter + count in one
# launch.  All intermediates are (Np, Np) with Np <= 512, so everything stays
# in vregs/VMEM with no HBM round trips.
# ----------------------------------------------------------------------------
def _unique_fused_kernel(x_col_ref, x_row_ref, vals_ref, cnt_ref):
    n = x_col_ref.shape[0]
    x_col = x_col_ref[...]                                         # (Np, 1)
    x_row = x_row_ref[...]                                         # (1, Np)
    j_col = lax.broadcasted_iota(jnp.int32, (n, 1), 0)             # sublane index j
    i_row = lax.broadcasted_iota(jnp.int32, (1, n), 1)             # lane index i

    eq = x_col == x_row                                            # eq[j,i] = (x[j]==x[i])
    # is_first along lanes:  is_first[i] = no j < i with x[j] == x[i].
    dup_row = jnp.sum((eq & (j_col < i_row)).astype(jnp.float32), axis=0, keepdims=True)
    isf_row = dup_row == 0.0                                       # (1, Np) bool
    # is_first along sublanes: is_first[j] = no i < j with x[i] == x[j].
    dup_col = jnp.sum((eq & (i_row < j_col)).astype(jnp.float32), axis=1, keepdims=True)
    isf_col = dup_col == 0.0                                       # (Np, 1) bool

    # rank[j] = #{distinct values < x[j]}  (VPU select + lane reduce).
    gt = x_col > x_row                                             # gt[j,i] = (x[j] > x[i])
    isf_row_f = isf_row.astype(jnp.float32)
    rank_col = jnp.sum(jnp.where(gt, isf_row_f, 0.0), axis=1, keepdims=True)   # (Np,1)
    rank_col = jnp.where(isf_col, rank_col, -1.0)                  # mask duplicates

    # Scatter first occurrences into sorted order (VPU select + sublane reduce).
    onehot = rank_col.astype(jnp.int32) == i_row                   # (Np, Np) bool
    x_col_f = x_col.astype(jnp.float32)
    vals = jnp.sum(jnp.where(onehot, x_col_f, 0.0), axis=0, keepdims=True)     # (1,Np)
    vals_ref[...] = vals.astype(vals_ref.dtype)
    cnt_ref[...] = jnp.sum(isf_row.astype(jnp.float32), axis=1, keepdims=True)


# ----------------------------------------------------------------------------
# Multi-tile path: three lane-dense passes, grid over i-tiles of width TM.
# Every kernel consumes the resident columns in j-chunks of size TM so the
# biggest live intermediate is a (TM, TM) block.
# ----------------------------------------------------------------------------
def _is_first_kernel(x_col_ref, x_tile_ref, isf_ref, *, tm):
    """is_first[i] = no j < i with x[j] == x[i].  Output (1, TM) f32 0/1."""
    t = pl.program_id(0)
    x_tile = x_tile_ref[...]                                       # (1, TM)
    i_row = lax.broadcasted_iota(jnp.int32, (1, tm), 1) + t * tm   # global i
    j_loc = lax.broadcasted_iota(jnp.int32, (tm, 1), 0)            # local j in chunk

    def body(c, dup):
        base = pl.multiple_of(c * tm, 128)
        x_chunk = x_col_ref[pl.ds(base, tm), :]                    # (TM, 1)
        hit = (x_chunk == x_tile) & ((c * tm + j_loc) < i_row)     # j_global < i_global
        return dup + jnp.sum(hit.astype(jnp.float32), axis=0, keepdims=True)

    # Triangular: only chunks c <= t can contain j < i for i in this tile.
    dup = lax.fori_loop(0, t + 1, body, jnp.zeros((1, tm), jnp.float32))
    isf_ref[...] = (dup == 0.0).astype(jnp.float32)


def _rank_kernel(isf_col_ref, x_col_ref, x_tile_ref, isf_tile_ref, rank_ref, *,
                 tm, n_chunks):
    """rank[i] = #distinct values < x[i]; -1 for non-first elements."""
    x_tile = x_tile_ref[...]                                       # (1, TM)

    def body(c, acc):
        base = pl.multiple_of(c * tm, 128)
        x_chunk = x_col_ref[pl.ds(base, tm), :]                    # (TM, 1)
        isf_chunk = isf_col_ref[pl.ds(base, tm), :]                # (TM, 1) f32 0/1
        less = x_chunk < x_tile                                    # (TM, TM) bool
        return acc + jnp.sum(jnp.where(less, isf_chunk, 0.0), axis=0, keepdims=True)

    rank = lax.fori_loop(0, n_chunks, body, jnp.zeros((1, tm), jnp.float32))
    rank_ref[...] = jnp.where(isf_tile_ref[...] > 0.5, rank, -1.0)


def _scatter_kernel(rank_col_ref, x_col_ref, vals_ref, *, tm, n_chunks):
    """out[k] = the unique value whose rank is k (0 past the unique count)."""
    t = pl.program_id(0)
    k_row = lax.broadcasted_iota(jnp.int32, (1, tm), 1) + t * tm   # global slot k

    def body(c, acc):
        base = pl.multiple_of(c * tm, 128)
        rank_chunk = rank_col_ref[pl.ds(base, tm), :].astype(jnp.int32)   # (TM, 1)
        x_chunk = x_col_ref[pl.ds(base, tm), :].astype(jnp.float32)       # (TM, 1)
        onehot = rank_chunk == k_row                                       # (TM, TM)
        return acc + jnp.sum(jnp.where(onehot, x_chunk, 0.0), axis=0, keepdims=True)

    vals = lax.fori_loop(0, n_chunks, body, jnp.zeros((1, tm), jnp.float32))
    vals_ref[...] = vals.astype(vals_ref.dtype)


# ----------------------------------------------------------------------------
# Wrappers
# ----------------------------------------------------------------------------
_FUSED_MAX_N = 512   # largest n handled by the single-launch fused kernel


def _vmem_capacity_bytes():
    try:
        return int(pltpu.get_tpu_info().vmem_capacity_bytes)
    except Exception:
        return 64 * 1024 * 1024   # conservative (v7x per-TensorCore VMEM)


def _pick_tile_and_limit(n):
    vmem = _vmem_capacity_bytes()
    if vmem >= 100 * 1024 * 1024:         # v5e / v6e: 128 MiB per TensorCore
        tm, limit = 512, 96 * 1024 * 1024
    else:                                 # v7x: 64 MiB per TensorCore
        tm, limit = 256, 48 * 1024 * 1024
    while tm > 128 and tm > n:            # never wider than the padded problem
        tm //= 2
    return tm, limit


def _pad_dual(flat, n_pad):
    """Pad with copies of flat[0] (never a new 'first occurrence') and return
    lane-dense row and sublane column views built in the wrapper (no in-kernel
    transposes)."""
    n = flat.shape[0]
    pad = jnp.full((n_pad - n,), flat[0], dtype=flat.dtype)
    xp = jnp.concatenate([flat, pad])
    return xp.reshape(1, n_pad), xp.reshape(n_pad, 1)


def _unique_fused(flat, vmem_limit):
    n = flat.shape[0]
    n_pad = max(128, ((n + 127) // 128) * 128)
    x_row, x_col = _pad_dual(flat, n_pad)
    vals, cnt = pl.pallas_call(
        _unique_fused_kernel,
        out_shape=(jax.ShapeDtypeStruct((1, n_pad), flat.dtype),
                   jax.ShapeDtypeStruct((1, 1), jnp.float32)),
        compiler_params=pltpu.CompilerParams(vmem_limit_bytes=vmem_limit),
    )(x_col, x_row)
    return vals[0], cnt[0, 0].astype(jnp.int32)


def _unique_tiled(flat, tm, vmem_limit):
    n = flat.shape[0]
    n_pad = ((n + tm - 1) // tm) * tm
    n_tiles = n_pad // tm
    x_row, x_col = _pad_dual(flat, n_pad)

    cparams = pltpu.CompilerParams(
        dimension_semantics=("parallel",),     # shard i-tiles across TensorCores
        vmem_limit_bytes=vmem_limit,
    )

    # Pass 1: first-occurrence mask (triangularized j-chunk loop in-kernel).
    is_first = pl.pallas_call(
        functools.partial(_is_first_kernel, tm=tm),
        out_shape=jax.ShapeDtypeStruct((1, n_pad), jnp.float32),
        grid=(n_tiles,),
        in_specs=[pl.BlockSpec((n_pad, 1), lambda t: (0, 0)),   # x column, resident
                  pl.BlockSpec((1, tm), lambda t: (0, t))],     # x tile, lane-dense
        out_specs=pl.BlockSpec((1, tm), lambda t: (0, t)),
        compiler_params=cparams,
    )(x_col, x_row)

    isf_col = is_first.reshape(n_pad, 1)

    # Pass 2: rank of every element among the distinct values (VPU mask-accumulate).
    rank = pl.pallas_call(
        functools.partial(_rank_kernel, tm=tm, n_chunks=n_tiles),
        out_shape=jax.ShapeDtypeStruct((1, n_pad), jnp.float32),
        grid=(n_tiles,),
        in_specs=[pl.BlockSpec((n_pad, 1), lambda t: (0, 0)),   # is_first column, resident
                  pl.BlockSpec((n_pad, 1), lambda t: (0, 0)),   # x column, resident
                  pl.BlockSpec((1, tm), lambda t: (0, t)),      # x tile
                  pl.BlockSpec((1, tm), lambda t: (0, t))],     # is_first tile
        out_specs=pl.BlockSpec((1, tm), lambda t: (0, t)),
        compiler_params=cparams,
    )(isf_col, x_col, x_row, is_first)

    rank_col = rank.reshape(n_pad, 1)

    # Pass 3: one-hot scatter of first occurrences into sorted order (VPU).
    vals = pl.pallas_call(
        functools.partial(_scatter_kernel, tm=tm, n_chunks=n_tiles),
        out_shape=jax.ShapeDtypeStruct((1, n_pad), flat.dtype),
        grid=(n_tiles,),
        in_specs=[pl.BlockSpec((n_pad, 1), lambda t: (0, 0)),   # rank column, resident
                  pl.BlockSpec((n_pad, 1), lambda t: (0, 0))],  # x column, resident
        out_specs=pl.BlockSpec((1, tm), lambda t: (0, t)),
        compiler_params=cparams,
    )(rank_col, x_col)

    cnt = jnp.sum(is_first).astype(jnp.int32)
    return vals[0], cnt


@jax.jit
def _unique_device(flat):
    n = flat.shape[0]                       # static under jit
    tm, vmem_limit = _pick_tile_and_limit(n)
    if n <= _FUSED_MAX_N:
        return _unique_fused(flat, vmem_limit)
    return _unique_tiled(flat, tm, vmem_limit)


def unique(x):
    """Equivalent of torch.unique(x): sorted unique values, 1-D output."""
    flat = x.reshape(-1)
    if flat.shape[0] == 0:
        # The actual LayerCase: unique of a zero-size tensor is an empty 1-D
        # tensor of the same dtype; Pallas cannot launch on zero-element arrays.
        return jnp.zeros((0,), dtype=x.dtype)
    vals, cnt = _unique_device(flat)
    k = int(jax.device_get(cnt))            # data-dependent size -> host sync
    return vals[:k]


if __name__ == "__main__":
    key = jax.random.PRNGKey(0)

    # Single-launch fused fast path (n = 12 -> Np = 128).
    x_small = jax.random.randint(key, (2, 6), 0, 5).astype(jnp.float32)
    got_small = unique(x_small)
    jax.block_until_ready(got_small)
    np.testing.assert_allclose(
        np.asarray(got_small), np.unique(np.asarray(jax.device_get(x_small))))

    # Multi-tile path (n = 600 -> 2-3 TM tiles depending on generation),
    # exercising the triangularized pass 1 and the chunked passes 2-3.
    x_mid = jax.random.randint(jax.random.PRNGKey(1), (3, 200), 0, 100).astype(jnp.float32)
    got_mid = unique(x_mid)
    jax.block_until_ready(got_mid)
    np.testing.assert_allclose(
        np.asarray(got_mid), np.unique(np.asarray(jax.device_get(x_mid))))

    # The actual LayerCase forward: torch.unique on a zero-size tensor.
    x = jax.random.normal(jax.random.PRNGKey(0), (0, 4), dtype=jnp.float32)
    out = unique(x)
    jax.block_until_ready(out)
    assert out.shape == (0,)
    assert out.dtype == x.dtype

    print("KERNEL_OK")
</pallas_src>

<mosaic_0001>
module attributes {stable_mosaic.version = 11 : i64} {
  func.func @_unique_fused_kernel(%arg0: memref<128x1xf32, #tpu.memory_space<vmem>>, %arg1: memref<1x128xf32, #tpu.memory_space<vmem>>, %arg2: memref<1x128xf32, #tpu.memory_space<vmem>>, %arg3: memref<1x1xf32, #tpu.memory_space<vmem>>) attributes {dimension_semantics = [], scalar_prefetch = 0 : i64, scratch_operands = 0 : i64, tpu.core_type = #tpu.core_type<tc>} {
    %c0 = arith.constant 0 : index
    %c0_0 = arith.constant 0 : index
    %0 = vector.load %arg0[%c0, %c0_0] : memref<128x1xf32, #tpu.memory_space<vmem>>, vector<128x1xf32>
    %c0_1 = arith.constant 0 : index
    %c0_2 = arith.constant 0 : index
    %1 = vector.load %arg1[%c0_1, %c0_2] : memref<1x128xf32, #tpu.memory_space<vmem>>, vector<1x128xf32>
    %2 = tpu.iota {dimensions = array<i32: 0>} : vector<128x1xi32>
    %3 = tpu.iota {dimensions = array<i32: 1>} : vector<1x128xi32>
    %4 = vector.broadcast %0 : vector<128x1xf32> to vector<128x128xf32>
    %5 = vector.broadcast %1 : vector<1x128xf32> to vector<128x128xf32>
    %6 = arith.cmpf oeq, %4, %5 : vector<128x128xf32>
    %7 = vector.broadcast %2 : vector<128x1xi32> to vector<128x128xi32>
    %8 = vector.broadcast %3 : vector<1x128xi32> to vector<128x128xi32>
    %9 = arith.cmpi slt, %7, %8 : vector<128x128xi32>
    %10 = arith.andi %6, %9 : vector<128x128xi1>
    %11 = arith.extui %10 : vector<128x128xi1> to vector<128x128xi32>
    %12 = arith.sitofp %11 : vector<128x128xi32> to vector<128x128xf32>
    %cst = arith.constant dense<0.000000e+00> : vector<128xf32>
    %13 = vector.multi_reduction <add>, %12, %cst [0] : vector<128x128xf32> to vector<128xf32>
    %14 = vector.shape_cast %13 : vector<128xf32> to vector<1x128xf32>
    %cst_3 = arith.constant 0.000000e+00 : f32
    %15 = vector.broadcast %cst_3 : f32 to vector<1x128xf32>
    %16 = arith.cmpf oeq, %14, %15 : vector<1x128xf32>
    %17 = vector.broadcast %3 : vector<1x128xi32> to vector<128x128xi32>
    %18 = vector.broadcast %2 : vector<128x1xi32> to vector<128x128xi32>
    %19 = arith.cmpi slt, %17, %18 : vector<128x128xi32>
    %20 = arith.andi %6, %19 : vector<128x128xi1>
    %21 = arith.extui %20 : vector<128x128xi1> to vector<128x128xi32>
    %22 = arith.sitofp %21 : vector<128x128xi32> to vector<128x128xf32>
    %cst_4 = arith.constant dense<0.000000e+00> : vector<128xf32>
    %23 = vector.multi_reduction <add>, %22, %cst_4 [1] : vector<128x128xf32> to vector<128xf32>
    %24 = vector.shape_cast %23 : vector<128xf32> to vector<128x1xf32>
    %cst_5 = arith.constant 0.000000e+00 : f32
    %25 = vector.broadcast %cst_5 : f32 to vector<128x1xf32>
    %26 = arith.cmpf oeq, %24, %25 : vector<128x1xf32>
    %27 = vector.broadcast %0 : vector<128x1xf32> to vector<128x128xf32>
    %28 = vector.broadcast %1 : vector<1x128xf32> to vector<128x128xf32>
    %29 = arith.cmpf ogt, %27, %28 : vector<128x128xf32>
    %30 = arith.extui %16 : vector<1x128xi1> to vector<1x128xi32>
    %31 = arith.sitofp %30 : vector<1x128xi32> to vector<1x128xf32>
    %cst_6 = arith.constant 0.000000e+00 : f32
    %32 = vector.shape_cast %31 : vector<1x128xf32> to vector<1x128xf32>
    %33 = vector.broadcast %32 : vector<1x128xf32> to vector<128x128xf32>
    %34 = vector.broadcast %cst_6 : f32 to vector<128x128xf32>
    %35 = arith.select %29, %33, %34 : vector<128x128xi1>, vector<128x128xf32>
    %cst_7 = arith.constant dense<0.000000e+00> : vector<128xf32>
    %36 = vector.multi_reduction <add>, %35, %cst_7 [1] : vector<128x128xf32> to vector<128xf32>
    %37 = vector.shape_cast %36 : vector<128xf32> to vector<128x1xf32>
    %cst_8 = arith.constant -1.000000e+00 : f32
    %38 = vector.broadcast %cst_8 : f32 to vector<128x1xf32>
    %39 = arith.select %26, %37, %38 : vector<128x1xi1>, vector<128x1xf32>
    %40 = arith.fptosi %39 : vector<128x1xf32> to vector<128x1xi32>
    %41 = vector.broadcast %40 : vector<128x1xi32> to vector<128x128xi32>
    %42 = vector.broadcast %3 : vector<1x128xi32> to vector<128x128xi32>
    %43 = arith.cmpi eq, %41, %42 : vector<128x128xi32>
    %cst_9 = arith.constant 0.000000e+00 : f32
    %44 = vector.shape_cast %0 : vector<128x1xf32> to vector<128x1xf32>
    %45 = vector.broadcast %44 : vector<128x1xf32> to vector<128x128xf32>
    %46 = vector.broadcast %cst_9 : f32 to vector<128x128xf32>
    %47 = arith.select %43, %45, %46 : vector<128x128xi1>, vector<128x128xf32>
    %cst_10 = arith.constant dense<0.000000e+00> : vector<128xf32>
    %48 = vector.multi_reduction <add>, %47, %cst_10 [0] : vector<128x128xf32> to vector<128xf32>
    %49 = vector.shape_cast %48 : vector<128xf32> to vector<1x128xf32>
    %c0_11 = arith.constant 0 : index
    %c0_12 = arith.constant 0 : index
    %50 = vector.load %arg2[%c0_11, %c0_12] : memref<1x128xf32, #tpu.memory_space<vmem>>, vector<1x128xf32>
    tpu.vector_store %arg2[%c0_11, %c0_12], %49 {strides = array<i32>} : memref<1x128xf32, #tpu.memory_space<vmem>>, vector<1x128xf32>,
    %51 = arith.extui %16 : vector<1x128xi1> to vector<1x128xi32>
    %52 = arith.sitofp %51 : vector<1x128xi32> to vector<1x128xf32>
    %cst_13 = arith.constant dense<0.000000e+00> : vector<1xf32>
    %53 = vector.multi_reduction <add>, %52, %cst_13 [1] : vector<1x128xf32> to vector<1xf32>
    %54 = vector.shape_cast %53 : vector<1xf32> to vector<1x1xf32>
    %c0_14 = arith.constant 0 : index
    %c0_15 = arith.constant 0 : index
    %55 = vector.load %arg3[%c0_14, %c0_15] : memref<1x1xf32, #tpu.memory_space<vmem>>, vector<1x1xf32>
    tpu.vector_store %arg3[%c0_14, %c0_15], %54 {strides = array<i32>} : memref<1x1xf32, #tpu.memory_space<vmem>>, vector<1x1xf32>,
    return
  }
}

</mosaic_0001>

<llo_original>
// kernel: _unique_device.1
$region0: #{_unique_device.1}
  #allocation0 [shape = 'u32[]', space=smem, size = 0x4, offset = 0x4, fixed_abs, tag = 'smem constant byte address 0x4 - core index']
  #allocation1 [shape = 'u32[144,128]{1,0:T(1,128)}', space=vmem, size = 0x12000, scoped, tag = 'internal scratch']
  %s0 = inlined_call_operand.vmem [shape: f32[128,1], index: 0, kind: input, shape index: {}]
  %s1 = inlined_call_operand.vmem [shape: f32[1,128], index: 1, kind: input, shape index: {}]
  %s2 = inlined_call_operand.hbm [shape: f32[1,128], index: 2, kind: output, shape index: {0}]
  %s3 = inlined_call_operand.hbm [shape: f32[1,1], index: 3, kind: output, shape index: {1}]
  %4 = xla_tuple %s2, %s3
  %s5 = sld [smem:[#allocation0]]
  $region26: #{_unique_device.1} parent=0
    _
  %s7 = ssub.s32 1, %s5
  %s8 = scalar_select 0, %s7, %s5
  $region1: #{_unique_device.1} parent=0
    #allocation2 [shape = 'u8[512]{0}', space=vmem, size = 0x400, scoped, tag = 'output window, operand 0, single buffered']
    #allocation3 [shape = 's32[1]{0}', space=sflag, size = 0x4, scoped, tag = 'scoped memory for _unique_device.1']
    #allocation4 [shape = 'u8[512]{0}', space=vmem, size = 0x400, scoped, tag = 'output window, operand 1, single buffered']
    #allocation5 [shape = 's32[1]{0}', space=sflag, size = 0x4, scoped, tag = 'scoped memory for _unique_device.1']
    %9 = vsyncpa [#allocation3], 0
    %10 = vsyncpa [#allocation5], 0
    // Predicated region
    $region2: #{_unique_device.1} parent=1 // pred_check
      _
    $region3: #{_unique_device.1} parent=1 // pred_check_branch
      %12 = sbr.rel (0) target = $region5
    $region4: #{_unique_device.1} parent=1 // pred_region
      _
    $region5: #{_unique_device.1} parent=1 // pred_fallthru
      _
    // Predicated region
    $region6: #{_unique_device.1} parent=1 // pred_check
      _
    $region7: #{_unique_device.1} parent=1 // pred_check_branch
      %14 = sbr.rel (0) target = $region9
    $region8: #{_unique_device.1} parent=1 // pred_region
      _
    $region9: #{_unique_device.1} parent=1 // pred_fallthru
      _
    %v15 = vld [vmem:[%s0] sm:$0xff]
    %v16 = vld [vmem:[%s0 + $0x8] sm:$0xff]
    %v17 = vld [vmem:[%s0 + $0x10] sm:$0xff]
    %v18 = vld [vmem:[%s0 + $0x18] sm:$0xff]
    %v19 = vld [vmem:[%s0 + $0x20] sm:$0xff]
    %v20 = vld [vmem:[%s0 + $0x28] sm:$0xff]
    %v21 = vld [vmem:[%s0 + $0x30] sm:$0xff]
    %v22 = vld [vmem:[%s0 + $0x38] sm:$0xff]
    %v23 = vld [vmem:[%s0 + $0x40] sm:$0xff]
    %v24 = vld [vmem:[%s0 + $0x48] sm:$0xff]
    %v25 = vld [vmem:[%s0 + $0x50] sm:$0xff]
    %v26 = vld [vmem:[%s0 + $0x58] sm:$0xff]
    %v27 = vld [vmem:[%s0 + $0x60] sm:$0xff]
    %v28 = vld [vmem:[%s0 + $0x68] sm:$0xff]
    %v29 = vld [vmem:[%s0 + $0x70] sm:$0xff]
    %v30 = vld [vmem:[%s0 + $0x78] sm:$0xff]
    %v31 = vld [vmem:[%s1] sm:$0x1]
    %v32 = vlaneseq
    %v33 = vshrl.u32 %v32, 7
    %v34 = vadd.s32 %v33, 8
    %v35 = vadd.s32 %v33, 16
    %v36 = vadd.s32 %v33, 24
    %v37 = vadd.s32 %v33, 32
    %v38 = vadd.s32 %v33, 40
    %v39 = vadd.s32 %v33, 48
    %v40 = vadd.s32 %v33, 56
    %v41 = vadd.s32 %v33, 64
    %v42 = vadd.s32 %v33, 72
    %v43 = vadd.s32 %v33, 80
    %v44 = vadd.s32 %v33, 88
    %v45 = vadd.s32 %v33, 96
    %v46 = vadd.s32 %v33, 104
    %v47 = vadd.s32 %v33, 112
    %v48 = vadd.s32 %v33, 120
    %v49 = vlaneseq
    %v50 = vand.u32 %v49, 127
    %52 = vset.pattern.permute.xlu0 0
    %53 = vperm.xlu0 %52, %v15
    %v54 = vpop.permute.xlu0 %53
    %57 = vset.pattern.permute.xlu0 0
    %58 = vperm.xlu0 %57, %v16
    %v59 = vpop.permute.xlu0 %58
    %62 = vset.pattern.permute.xlu0 0
    %63 = vperm.xlu0 %62, %v17
    %v64 = vpop.permute.xlu0 %63
    %67 = vset.pattern.permute.xlu0 0
    %68 = vperm.xlu0 %67, %v18
    %v69 = vpop.permute.xlu0 %68
    %72 = vset.pattern.permute.xlu0 0
    %73 = vperm.xlu0 %72, %v19
    %v74 = vpop.permute.xlu0 %73
    %77 = vset.pattern.permute.xlu0 0
    %78 = vperm.xlu0 %77, %v20
    %v79 = vpop.permute.xlu0 %78
    %82 = vset.pattern.permute.xlu0 0
    %83 = vperm.xlu0 %82, %v21
    %v84 = vpop.permute.xlu0 %83
    %87 = vset.pattern.permute.xlu0 0
    %88 = vperm.xlu0 %87, %v22
    %v89 = vpop.permute.xlu0 %88
    %92 = vset.pattern.permute.xlu0 0
    %93 = vperm.xlu0 %92, %v23
    %v94 = vpop.permute.xlu0 %93
    %97 = vset.pattern.permute.xlu0 0
    %98 = vperm.xlu0 %97, %v24
    %v99 = vpop.permute.xlu0 %98
    %102 = vset.pattern.permute.xlu0 0
    %103 = vperm.xlu0 %102, %v25
    %v104 = vpop.permute.xlu0 %103
    %107 = vset.pattern.permute.xlu0 0
    %108 = vperm.xlu0 %107, %v26
    %v109 = vpop.permute.xlu0 %108
    %112 = vset.pattern.permute.xlu0 0
    %113 = vperm.xlu0 %112, %v27
    %v114 = vpop.permute.xlu0 %113
    %117 = vset.pattern.permute.xlu0 0
    %118 = vperm.xlu0 %117, %v28
    %v119 = vpop.permute.xlu0 %118
    %122 = vset.pattern.permute.xlu0 0
    %123 = vperm.xlu0 %122, %v29
    %v124 = vpop.permute.xlu0 %123
    %127 = vset.pattern.permute.xlu0 0
    %128 = vperm.xlu0 %127, %v30
    %v129 = vpop.permute.xlu0 %128
    %v132 = vlaneseq
    %v133 = vshrl.u32 %v132, 7
    %v134 = vsub.s32 0, %v133
    %v135 = vrot.slane %v31, %v134
    %vm137 = vcmp.eq.f32.partialorder %v54, %v135
    %vm138 = vcmp.eq.f32.partialorder %v59, %v135
    %vm139 = vcmp.eq.f32.partialorder %v64, %v135
    %vm140 = vcmp.eq.f32.partialorder %v69, %v135
    %vm141 = vcmp.eq.f32.partialorder %v74, %v135
    %vm142 = vcmp.eq.f32.partialorder %v79, %v135
    %vm143 = vcmp.eq.f32.partialorder %v84, %v135
    %vm144 = vcmp.eq.f32.partialorder %v89, %v135
    %vm145 = vcmp.eq.f32.partialorder %v94, %v135
    %vm146 = vcmp.eq.f32.partialorder %v99, %v135
    %vm147 = vcmp.eq.f32.partialorder %v104, %v135
    %vm148 = vcmp.eq.f32.partialorder %v109, %v135
    %vm149 = vcmp.eq.f32.partialorder %v114, %v135
    %vm150 = vcmp.eq.f32.partialorder %v119, %v135
    %vm151 = vcmp.eq.f32.partialorder %v124, %v135
    %vm152 = vcmp.eq.f32.partialorder %v129, %v135
    %vm153 = vcmp.lt.s32.totalorder %v33, %v50
    %vm154 = vcmp.lt.s32.totalorder %v34, %v50
    %vm155 = vcmp.lt.s32.totalorder %v35, %v50
    %vm156 = vcmp.lt.s32.totalorder %v36, %v50
    %vm157 = vcmp.lt.s32.totalorder %v37, %v50
    %vm158 = vcmp.lt.s32.totalorder %v38, %v50
    %vm159 = vcmp.lt.s32.totalorder %v39, %v50
    %vm160 = vcmp.lt.s32.totalorder %v40, %v50
    %vm161 = vcmp.lt.s32.totalorder %v41, %v50
    %vm162 = vcmp.lt.s32.totalorder %v42, %v50
    %vm163 = vcmp.lt.s32.totalorder %v43, %v50
    %vm164 = vcmp.lt.s32.totalorder %v44, %v50
    %vm165 = vcmp.lt.s32.totalorder %v45, %v50
    %vm166 = vcmp.lt.s32.totalorder %v46, %v50
    %vm167 = vcmp.lt.s32.totalorder %v47, %v50
    %vm168 = vcmp.lt.s32.totalorder %v48, %v50
    %vm169 = vmand %vm137, %vm153
    %vm170 = vmand %vm138, %vm154
    %vm171 = vmand %vm139, %vm155
    %vm172 = vmand %vm140, %vm156
    %vm173 = vmand %vm141, %vm157
    %vm174 = vmand %vm142, %vm158
    %vm175 = vmand %vm143, %vm159
    %vm176 = vmand %vm144, %vm160
    %vm177 = vmand %vm145, %vm161
    %vm178 = vmand %vm146, %vm162
    %vm179 = vmand %vm147, %vm163
    %vm180 = vmand %vm148, %vm164
    %vm181 = vmand %vm149, %vm165
    %vm182 = vmand %vm150, %vm166
    %vm183 = vmand %vm151, %vm167
    %vm184 = vmand %vm152, %vm168
    %v185 = vsel %vm169, 1, 0
    %v186 = vsel %vm170, 1, 0
    %v187 = vsel %vm171, 1, 0
    %v188 = vsel %vm172, 1, 0
    %v189 = vsel %vm173, 1, 0
    %v190 = vsel %vm174, 1, 0
    %v191 = vsel %vm175, 1, 0
    %v192 = vsel %vm176, 1, 0
    %v193 = vsel %vm177, 1, 0
    %v194 = vsel %vm178, 1, 0
    %v195 = vsel %vm179, 1, 0
    %v196 = vsel %vm180, 1, 0
    %v197 = vsel %vm181, 1, 0
    %v198 = vsel %vm182, 1, 0
    %v199 = vsel %vm183, 1, 0
    %v200 = vsel %vm184, 1, 0
    %v201 = vcvt.s32.f32 %v185
    %v202 = vcvt.s32.f32 %v186
    %v203 = vcvt.s32.f32 %v187
    %v204 = vcvt.s32.f32 %v188
    %v205 = vcvt.s32.f32 %v189
    %v206 = vcvt.s32.f32 %v190
    %v207 = vcvt.s32.f32 %v191
    %v208 = vcvt.s32.f32 %v192
    %v209 = vcvt.s32.f32 %v193
    %v210 = vcvt.s32.f32 %v194
    %v211 = vcvt.s32.f32 %v195
    %v212 = vcvt.s32.f32 %v196
    %v213 = vcvt.s32.f32 %v197
    %v214 = vcvt.s32.f32 %v198
    %v215 = vcvt.s32.f32 %v199
    %v216 = vcvt.s32.f32 %v200
    %v217 = vadd.f32 %v201, %v202
    %v218 = vadd.f32 %v217, %v203
    %v219 = vadd.f32 %v218, %v204
    %v220 = vadd.f32 %v219, %v205
    %v221 = vadd.f32 %v220, %v206
    %v222 = vadd.f32 %v221, %v207
    %v223 = vadd.f32 %v222, %v208
    %v224 = vadd.f32 %v223, %v209
    %v225 = vadd.f32 %v224, %v210
    %v226 = vadd.f32 %v225, %v211
    %v227 = vadd.f32 %v226, %v212
    %v228 = vadd.f32 %v227, %v213
    %v229 = vadd.f32 %v228, %v214
    %v230 = vadd.f32 %v229, %v215
    %v231 = vadd.f32 %v230, %v216
    %v232 = vrot.slane %v231, 4
    %v233 = vadd.f32 %v231, %v232
    %v234 = vrot.slane %v233, 2
    %v235 = vadd.f32 %v233, %v234
    %v236 = vrot.slane %v235, 1
    %v237 = vadd.f32 %v235, %v236
    %vm238 = vcmp.eq.f32.partialorder %v237, 0.0
    %vm239 = vcmp.lt.s32.totalorder %v50, %v33
    %vm240 = vcmp.lt.s32.totalorder %v50, %v34
    %vm241 = vcmp.lt.s32.totalorder %v50, %v35
    %vm242 = vcmp.lt.s32.totalorder %v50, %v36
    %vm243 = vcmp.lt.s32.totalorder %v50, %v37
    %vm244 = vcmp.lt.s32.totalorder %v50, %v38
    %vm245 = vcmp.lt.s32.totalorder %v50, %v39
    %vm246 = vcmp.lt.s32.totalorder %v50, %v40
    %vm247 = vcmp.lt.s32.totalorder %v50, %v41
    %vm248 = vcmp.lt.s32.totalorder %v50, %v42
    %vm249 = vcmp.lt.s32.totalorder %v50, %v43
    %vm250 = vcmp.lt.s32.totalorder %v50, %v44
    %vm251 = vcmp.lt.s32.totalorder %v50, %v45
    %vm252 = vcmp.lt.s32.totalorder %v50, %v46
    %vm253 = vcmp.lt.s32.totalorder %v50, %v47
    %vm254 = vcmp.lt.s32.totalorder %v50, %v48
    %vm255 = vmand %vm137, %vm239
    %vm256 = vmand %vm138, %vm240
    %vm257 = vmand %vm139, %vm241
    %vm258 = vmand %vm140, %vm242
    %vm259 = vmand %vm141, %vm243
    %vm260 = vmand %vm142, %vm244
    %vm261 = vmand %vm143, %vm245
    %vm262 = vmand %vm144, %vm246
    %vm263 = vmand %vm145, %vm247
    %vm264 = vmand %vm146, %vm248
    %vm265 = vmand %vm147, %vm249
    %vm266 = vmand %vm148, %vm250
    %vm267 = vmand %vm149, %vm251
    %vm268 = vmand %vm150, %vm252
    %vm269 = vmand %vm151, %vm253
    %vm270 = vmand %vm152, %vm254
    %v271 = vsel %vm255, 1, 0
    %v272 = vsel %vm256, 1, 0
    %v273 = vsel %vm257, 1, 0
    %v274 = vsel %vm258, 1, 0
    %v275 = vsel %vm259, 1, 0
    %v276 = vsel %vm260, 1, 0
    %v277 = vsel %vm261, 1, 0
    %v278 = vsel %vm262, 1, 0
    %v279 = vsel %vm263, 1, 0
    %v280 = vsel %vm264, 1, 0
    %v281 = vsel %vm265, 1, 0
    %v282 = vsel %vm266, 1, 0
    %v283 = vsel %vm267, 1, 0
    %v284 = vsel %vm268, 1, 0
    %v285 = vsel %vm269, 1, 0
    %v286 = vsel %vm270, 1, 0
    %v287 = vcvt.s32.f32 %v271
    %v288 = vcvt.s32.f32 %v272
    %v289 = vcvt.s32.f32 %v273
    %v290 = vcvt.s32.f32 %v274
    %v291 = vcvt.s32.f32 %v275
    %v292 = vcvt.s32.f32 %v276
    %v293 = vcvt.s32.f32 %v277
    %v294 = vcvt.s32.f32 %v278
    %v295 = vcvt.s32.f32 %v279
    %v296 = vcvt.s32.f32 %v280
    %v297 = vcvt.s32.f32 %v281
    %v298 = vcvt.s32.f32 %v282
    %v299 = vcvt.s32.f32 %v283
    %v300 = vcvt.s32.f32 %v284
    %v301 = vcvt.s32.f32 %v285
    %v302 = vcvt.s32.f32 %v286
    %303 = vadd.xlane.f32.xlu0 %v287
    %v304 = vpop.xlane.xlu0 %303
    %305 = vadd.xlane.f32.xlu0 %v288
    %v306 = vpop.xlane.xlu0 %305
    %307 = vadd.xlane.f32.xlu0 %v289
    %v308 = vpop.xlane.xlu0 %307
    %309 = vadd.xlane.f32.xlu0 %v290
    %v310 = vpop.xlane.xlu0 %309
    %311 = vadd.xlane.f32.xlu0 %v291
    %v312 = vpop.xlane.xlu0 %311
    %313 = vadd.xlane.f32.xlu0 %v292
    %v314 = vpop.xlane.xlu0 %313
    %315 = vadd.xlane.f32.xlu0 %v293
    %v316 = vpop.xlane.xlu0 %315
    %317 = vadd.xlane.f32.xlu0 %v294
    %v318 = vpop.xlane.xlu0 %317
    %319 = vadd.xlane.f32.xlu0 %v295
    %v320 = vpop.xlane.xlu0 %319
    %321 = vadd.xlane.f32.xlu0 %v296
    %v322 = vpop.xlane.xlu0 %321
    %323 = vadd.xlane.f32.xlu0 %v297
    %v324 = vpop.xlane.xlu0 %323
    %325 = vadd.xlane.f32.xlu0 %v298
    %v326 = vpop.xlane.xlu0 %325
    %327 = vadd.xlane.f32.xlu0 %v299
    %v328 = vpop.xlane.xlu0 %327
    %329 = vadd.xlane.f32.xlu0 %v300
    %v330 = vpop.xlane.xlu0 %329
    %331 = vadd.xlane.f32.xlu0 %v301
    %v332 = vpop.xlane.xlu0 %331
    %333 = vadd.xlane.f32.xlu0 %v302
    %v334 = vpop.xlane.xlu0 %333
    %vm335 = vcmp.eq.f32.partialorder %v304, 0.0
    %vm336 = vcmp.eq.f32.partialorder %v306, 0.0
    %vm337 = vcmp.eq.f32.partialorder %v308, 0.0
    %vm338 = vcmp.eq.f32.partialorder %v310, 0.0
    %vm339 = vcmp.eq.f32.partialorder %v312, 0.0
    %vm340 = vcmp.eq.f32.partialorder %v314, 0.0
    %vm341 = vcmp.eq.f32.partialorder %v316, 0.0
    %vm342 = vcmp.eq.f32.partialorder %v318, 0.0
    %vm343 = vcmp.eq.f32.partialorder %v320, 0.0
    %vm344 = vcmp.eq.f32.partialorder %v322, 0.0
    %vm345 = vcmp.eq.f32.partialorder %v324, 0.0
    %vm346 = vcmp.eq.f32.partialorder %v326, 0.0
    %vm347 = vcmp.eq.f32.partialorder %v328, 0.0
    %vm348 = vcmp.eq.f32.partialorder %v330, 0.0
    %vm349 = vcmp.eq.f32.partialorder %v332, 0.0
    %vm350 = vcmp.eq.f32.partialorder %v334, 0.0
    %vm351 = vcmp.gt.f32.partialorder %v54, %v135
    %vm352 = vcmp.gt.f32.partialorder %v59, %v135
    %vm353 = vcmp.gt.f32.partialorder %v64, %v135
    %vm354 = vcmp.gt.f32.partialorder %v69, %v135
    %vm355 = vcmp.gt.f32.partialorder %v74, %v135
    %vm356 = vcmp.gt.f32.partialorder %v79, %v135
    %vm357 = vcmp.gt.f32.partialorder %v84, %v135
    %vm358 = vcmp.gt.f32.partialorder %v89, %v135
    %vm359 = vcmp.gt.f32.partialorder %v94, %v135
    %vm360 = vcmp.gt.f32.partialorder %v99, %v135
    %vm361 = vcmp.gt.f32.partialorder %v104, %v135
    %vm362 = vcmp.gt.f32.partialorder %v109, %v135
    %vm363 = vcmp.gt.f32.partialorder %v114, %v135
    %vm364 = vcmp.gt.f32.partialorder %v119, %v135
    %vm365 = vcmp.gt.f32.partialorder %v124, %v135
    %vm366 = vcmp.gt.f32.partialorder %v129, %v135
    %v367 = vsel %vm238, 1, 0
    %v368 = vcvt.s32.f32 %v367
    %v369 = vsel %vm351, %v368, 0.0
    %v370 = vsel %vm352, %v368, 0.0
    %v371 = vsel %vm353, %v368, 0.0
    %v372 = vsel %vm354, %v368, 0.0
    %v373 = vsel %vm355, %v368, 0.0
    %v374 = vsel %vm356, %v368, 0.0
    %v375 = vsel %vm357, %v368, 0.0
    %v376 = vsel %vm358, %v368, 0.0
    %v377 = vsel %vm359, %v368, 0.0
    %v378 = vsel %vm360, %v368, 0.0
    %v379 = vsel %vm361, %v368, 0.0
    %v380 = vsel %vm362, %v368, 0.0
    %v381 = vsel %vm363, %v368, 0.0
    %v382 = vsel %vm364, %v368, 0.0
    %v383 = vsel %vm365, %v368, 0.0
    %v384 = vsel %vm366, %v368, 0.0
    %385 = vadd.xlane.f32.xlu0 %v369
    %v386 = vpop.xlane.xlu0 %385
    %387 = vadd.xlane.f32.xlu0 %v370
    %v388 = vpop.xlane.xlu0 %387
    %389 = vadd.xlane.f32.xlu0 %v371
    %v390 = vpop.xlane.xlu0 %389
    %391 = vadd.xlane.f32.xlu0 %v372
    %v392 = vpop.xlane.xlu0 %391
    %393 = vadd.xlane.f32.xlu0 %v373
    %v394 = vpop.xlane.xlu0 %393
    %395 = vadd.xlane.f32.xlu0 %v374
    %v396 = vpop.xlane.xlu0 %395
    %397 = vadd.xlane.f32.xlu0 %v375
    %v398 = vpop.xlane.xlu0 %397
    %399 = vadd.xlane.f32.xlu0 %v376
    %v400 = vpop.xlane.xlu0 %399
    %401 = vadd.xlane.f32.xlu0 %v377
    %v402 = vpop.xlane.xlu0 %401
    %403 = vadd.xlane.f32.xlu0 %v378
    %v404 = vpop.xlane.xlu0 %403
    %405 = vadd.xlane.f32.xlu0 %v379
    %v406 = vpop.xlane.xlu0 %405
    %407 = vadd.xlane.f32.xlu0 %v380
    %v408 = vpop.xlane.xlu0 %407
    %409 = vadd.xlane.f32.xlu0 %v381
    %v410 = vpop.xlane.xlu0 %409
    %411 = vadd.xlane.f32.xlu0 %v382
    %v412 = vpop.xlane.xlu0 %411
    %413 = vadd.xlane.f32.xlu0 %v383
    %v414 = vpop.xlane.xlu0 %413
    %415 = vadd.xlane.f32.xlu0 %v384
    %v416 = vpop.xlane.xlu0 %415
    %v417 = vsel %vm335, %v386, -1.0
    %v418 = vsel %vm336, %v388, -1.0
    %v419 = vsel %vm337, %v390, -1.0
    %v420 = vsel %vm338, %v392, -1.0
    %v421 = vsel %vm339, %v394, -1.0
    %v422 = vsel %vm340, %v396, -1.0
    %v423 = vsel %vm341, %v398, -1.0
    %v424 = vsel %vm342, %v400, -1.0
    %v425 = vsel %vm343, %v402, -1.0
    %v426 = vsel %vm344, %v404, -1.0
    %v427 = vsel %vm345, %v406, -1.0
    %v428 = vsel %vm346, %v408, -1.0
    %v429 = vsel %vm347, %v410, -1.0
    %v430 = vsel %vm348, %v412, -1.0
    %v431 = vsel %vm349, %v414, -1.0
    %v432 = vsel %vm350, %v416, -1.0
    %v433 = vcvt.f32.s32.to.zero.pseudo %v417
    %v434 = vcvt.f32.s32.to.zero.pseudo %v418
    %v435 = vcvt.f32.s32.to.zero.pseudo %v419
    %v436 = vcvt.f32.s32.to.zero.pseudo %v420
    %v437 = vcvt.f32.s32.to.zero.pseudo %v421
    %v438 = vcvt.f32.s32.to.zero.pseudo %v422
    %v439 = vcvt.f32.s32.to.zero.pseudo %v423
    %v440 = vcvt.f32.s32.to.zero.pseudo %v424
    %v441 = vcvt.f32.s32.to.zero.pseudo %v425
    %v442 = vcvt.f32.s32.to.zero.pseudo %v426
    %v443 = vcvt.f32.s32.to.zero.pseudo %v427
    %v444 = vcvt.f32.s32.to.zero.pseudo %v428
    %v445 = vcvt.f32.s32.to.zero.pseudo %v429
    %v446 = vcvt.f32.s32.to.zero.pseudo %v430
    %v447 = vcvt.f32.s32.to.zero.pseudo %v431
    %v448 = vcvt.f32.s32.to.zero.pseudo %v432
    %vm449 = vcmp.eq.s32.totalorder %v433, %v50
    %vm450 = vcmp.eq.s32.totalorder %v434, %v50
    %vm451 = vcmp.eq.s32.totalorder %v435, %v50
    %vm452 = vcmp.eq.s32.totalorder %v436, %v50
    %vm453 = vcmp.eq.s32.totalorder %v437, %v50
    %vm454 = vcmp.eq.s32.totalorder %v438, %v50
    %vm455 = vcmp.eq.s32.totalorder %v439, %v50
    %vm456 = vcmp.eq.s32.totalorder %v440, %v50
    %vm457 = vcmp.eq.s32.totalorder %v441, %v50
    %vm458 = vcmp.eq.s32.totalorder %v442, %v50
    %vm459 = vcmp.eq.s32.totalorder %v443, %v50
    %vm460 = vcmp.eq.s32.totalorder %v444, %v50
    %vm461 = vcmp.eq.s32.totalorder %v445, %v50
    %vm462 = vcmp.eq.s32.totalorder %v446, %v50
    %vm463 = vcmp.eq.s32.totalorder %v447, %v50
    %vm464 = vcmp.eq.s32.totalorder %v448, %v50
    %v465 = vsel %vm449, %v54, 0.0
    %v466 = vsel %vm450, %v59, 0.0
    %v467 = vsel %vm451, %v64, 0.0
    %v468 = vsel %vm452, %v69, 0.0
    %v469 = vsel %vm453, %v74, 0.0
    %v470 = vsel %vm454, %v79, 0.0
    %v471 = vsel %vm455, %v84, 0.0
    %v472 = vsel %vm456, %v89, 0.0
    %v473 = vsel %vm457, %v94, 0.0
    %v474 = vsel %vm458, %v99, 0.0
    %v475 = vsel %vm459, %v104, 0.0
    %v476 = vsel %vm460, %v109, 0.0
    %v477 = vsel %vm461, %v114, 0.0
    %v478 = vsel %vm462, %v119, 0.0
    %v479 = vsel %vm463, %v124, 0.0
    %v480 = vsel %vm464, %v129, 0.0
    %v481 = vadd.f32 %v465, %v466
    %v482 = vadd.f32 %v481, %v467
    %v483 = vadd.f32 %v482, %v468
    %v484 = vadd.f32 %v483, %v469
    %v485 = vadd.f32 %v484, %v470
    %v486 = vadd.f32 %v485, %v471
    %v487 = vadd.f32 %v486, %v472
    %v488 = vadd.f32 %v487, %v473
    %v489 = vadd.f32 %v488, %v474
    %v490 = vadd.f32 %v489, %v475
    %v491 = vadd.f32 %v490, %v476
    %v492 = vadd.f32 %v491, %v477
    %v493 = vadd.f32 %v492, %v478
    %v494 = vadd.f32 %v493, %v479
    %v495 = vadd.f32 %v494, %v480
    %v496 = vrot.slane %v495, 4
    %v497 = vadd.f32 %v495, %v496
    %v498 = vrot.slane %v497, 2
    %v499 = vadd.f32 %v497, %v498
    %v500 = vrot.slane %v499, 1
    %v501 = vadd.f32 %v499, %v500
    %502 = vst [vmem:[#allocation2] sm:$0x1] %v501
    %503 = vadd.xlane.f32.xlu0 %v368
    %v504 = vpop.xlane.xlu0 %503
    %vm505 = vcmask 0
    %506 = vst.msk [vmem:[#allocation4] sm:$0x1] %vm505, %v504
    // Predicated region
    $region10: #{_unique_device.1} parent=1 // pred_check
      _
    $region11: #{_unique_device.1} parent=1 // pred_check_branch
      %508 = sbr.rel (0) target = $region13
    $region12: #{_unique_device.1} parent=1 // pred_region
      %s510 = ssub.s32 16, 16
      %511 = vsyncadd [#allocation3], %s510
      %s513 = sshll.u32 [#allocation2], 4
      %s514 = int_to_ptr.vmem [resolvable:$true] %s513
      %516 = dma.vmem_to_hbm [thread:$0]  %s514, 16, %s2, [#allocation3]
    $region13: #{_unique_device.1} parent=1 // pred_fallthru
      _
    // Predicated region
    $region14: #{_unique_device.1} parent=1 // pred_check
      _
    $region15: #{_unique_device.1} parent=1 // pred_check_branch
      %518 = sbr.rel (0) target = $region17
    $region16: #{_unique_device.1} parent=1 // pred_region
      %s520 = ssub.s32 16, 16
      %521 = vsyncadd [#allocation5], %s520
      %s523 = sshll.u32 [#allocation4], 4
      %s524 = int_to_ptr.vmem [resolvable:$true] %s523
      %526 = dma.vmem_to_hbm [thread:$0]  %s524, 16, %s3, [#allocation5]
    $region17: #{_unique_device.1} parent=1 // pred_fallthru
      _
    // Predicated region
    $region18: #{_unique_device.1} parent=1 // pred_check
      _
    $region19: #{_unique_device.1} parent=1 // pred_check_branch
      %528 = sbr.rel (0) target = $region21
    $region20: #{_unique_device.1} parent=1 // pred_region
      %529 = dma.done [#allocation3], 16
    $region21: #{_unique_device.1} parent=1 // pred_fallthru
      _
    // Predicated region
    $region22: #{_unique_device.1} parent=1 // pred_check
      _
    $region23: #{_unique_device.1} parent=1 // pred_check_branch
      %531 = sbr.rel (0) target = $region25
    $region24: #{_unique_device.1} parent=1 // pred_region
      %532 = dma.done [#allocation5], 16
    $region25: #{_unique_device.1} parent=1 // pred_fallthru
      _
    %533 = vsyncpa [#allocation3], 1
    %534 = vsyncpa [#allocation5], 1

</llo_original>
